<compile_context>
chip_gen: v5e
topology: v5e:2x2
jax: 0.10.0
libtpu: 0.0.40
codegen_flags: <defaults>
</compile_context>

<pallas_src>
import functools

import numpy as np
import jax
import jax.numpy as jnp
from jax import lax
from jax.experimental import pallas as pl
from jax.experimental.pallas import tpu as pltpu

NUM_CLASSES = 24
LANES = 128
CHUNK_ROWS = 192            # in-kernel compute chunk: multiple of 8 (sublanes) and 3 (weight period)
MAX_CHUNKS_PER_TILE = 12    # DMA tile = 12 * 192 = 2304 rows -> 1.125 MiB per f32 input block

_CLASS_WEIGHTS_NP = np.array(
    [0.04, 0.04, 0.02, 0.07, 0.04, 0.04, 0.04, 0.04, 0.04, 0.04, 0.04, 0.04,
     0.04, 0.04, 0.04, 0.04, 0.04, 0.04, 0.06, 0.02, 0.04, 0.07, 0.04, 0.04],
    dtype=np.float32,
)
CLASS_WEIGHTS = jnp.asarray(_CLASS_WEIGHTS_NP)


def _neg_weight_block(rows):
    # Flat element f = row*128 + lane belongs to class f % 24.  Since 3*128 = 16*24,
    # the lane pattern repeats every 3 rows; `rows` is a multiple of 3 so every chunk
    # (which starts at a global row that is a multiple of 3) can reuse this one block.
    idx = np.arange(rows * LANES) % NUM_CLASSES
    return jnp.asarray((-_CLASS_WEIGHTS_NP)[idx].reshape(rows, LANES))


_NEGW_BLOCK = _neg_weight_block(CHUNK_ROWS)   # (192, 128) f32, resident in VMEM


def _cdiv(a, b):
    return -(-a // b)


def _make_kernel(*, n_rows, tile_rows, chunks_per_tile, tiles_per_shard, inv_n,
                 binary_targets):
    """inv_n = 1 / (true_B * 24); n_rows = real folded rows (rest is masked)."""

    def kernel(x_ref, t_ref, w_ref, o_ref, acc_ref):
        s = pl.program_id(0)          # shard (TensorCore) axis, "parallel"
        j = pl.program_id(1)          # tile axis within shard, "arbitrary"

        @pl.when(j == 0)
        def _init():
            acc_ref[...] = jnp.zeros_like(acc_ref)

        logical_tile = s * tiles_per_shard + j
        tile_start = logical_tile * tile_rows

        negw = w_ref[...]                                                  # (192, 128)
        row_iota = lax.broadcasted_iota(jnp.int32, (CHUNK_ROWS, LANES), 0)

        part = jnp.zeros((8, LANES), jnp.float32)
        for c in range(chunks_per_tile):                                   # static unroll
            lo, hi = c * CHUNK_ROWS, (c + 1) * CHUNK_ROWS
            # Rows of this chunk that hold real data (<=0 for fully-padded/phantom chunks).
            limit = n_rows - tile_start - c * CHUNK_ROWS
            valid = row_iota < limit

            x = x_ref[lo:hi, :].astype(jnp.float32)
            # Single finiteness test: NaN and +-Inf compare False; OOB rows also zeroed.
            x = jnp.where(jnp.logical_and(jnp.abs(x) < jnp.inf, valid), x, 0.0)
            t_raw = t_ref[lo:hi, :]

            if binary_targets:
                # Hard {0,1} targets: one log per element.  Masked rows get p = 1 -> 0.
                pos = jnp.logical_and(t_raw != 0, valid)
                p = jnp.where(pos, x, 1.0 - x)
                contrib = negw * jnp.maximum(jnp.log(p), -100.0)
            else:
                # General (soft-label capable) two-log path; negation folded into negw.
                t = jnp.where(valid, t_raw.astype(jnp.float32), 0.0)
                log_x = jnp.maximum(jnp.log(x), -100.0)
                log_1mx = jnp.maximum(jnp.log(1.0 - x), -100.0)
                contrib = negw * (log_1mx + t * (log_x - log_1mx))

            # Tile-aligned reduce of the chunk to a single vreg; carried in registers.
            part = part + jnp.sum(contrib.reshape(CHUNK_ROWS // 8, 8, LANES), axis=0)

        acc_ref[...] += part          # one (8,128) VMEM read-modify-write per grid step

        @pl.when(j == pl.num_programs(1) - 1)
        def _finalize():
            total = jnp.sum(acc_ref[...]) * inv_n
            o_ref[...] = jnp.full((1, 8, LANES), total, dtype=jnp.float32)

    return kernel


def class_weighted_panns_loss(inputs, target, *, binary_targets=None,
                              max_chunks_per_tile=MAX_CHUNKS_PER_TILE):
    """inputs: dict with 'clipwise_output' of shape (B, 24); target: (B, 24).

    target may be bool / int8 / bf16 / f32; bool is converted to int8 and kept narrow.
    Integer/bool targets are assumed multi-hot {0,1} and take the single-log fast path;
    pass binary_targets=False to force the general (soft-label) path.
    """
    x = inputs["clipwise_output"]
    B, C = x.shape
    assert C == NUM_CLASSES, "class weights are defined for 24 classes"
    assert target.shape == (B, C)

    if target.dtype == jnp.bool_:
        target = target.astype(jnp.int8)                 # keep narrow, avoid i1 refs
        if binary_targets is None:
            binary_targets = True
    if binary_targets is None:
        binary_targets = bool(jnp.issubdtype(target.dtype, jnp.integer))

    inv_n = 1.0 / float(B * C)                           # divide by the TRUE element count

    # Fold (B, 24) -> (n_rows, 128).  Free bitcast reshape when B % 16 == 0
    # (16*24 == 3*128); otherwise pad a few rows (x=0, t=0 contributes exactly 0).
    if B % 16:
        pad_b = 16 - B % 16
        x = jnp.pad(x, ((0, pad_b), (0, 0)))
        target = jnp.pad(target, ((0, pad_b), (0, 0)))
    n_rows = (x.shape[0] * C) // LANES
    x_f = x.reshape(n_rows, LANES)
    t_f = target.reshape(n_rows, LANES)

    chunks_per_tile = max(1, min(max_chunks_per_tile, _cdiv(n_rows, CHUNK_ROWS)))
    tile_rows = CHUNK_ROWS * chunks_per_tile             # multiple of 24 -> weight period ok
    n_tiles = _cdiv(n_rows, tile_rows)
    num_shards = 2 if n_tiles >= 2 else 1                # v7x: one shard per TensorCore
    tiles_per_shard = _cdiv(n_tiles, num_shards)

    def data_map(s, j):
        # Clamp so the DMA never starts past the array; phantom tiles (only possible
        # when n_tiles is odd) are fully masked in-kernel via the row limit.
        return (jnp.minimum(s * tiles_per_shard + j, n_tiles - 1), 0)

    kernel = _make_kernel(n_rows=n_rows, tile_rows=tile_rows,
                          chunks_per_tile=chunks_per_tile,
                          tiles_per_shard=tiles_per_shard,
                          inv_n=inv_n, binary_targets=binary_targets)

    x_bytes = jnp.dtype(x_f.dtype).itemsize
    t_bytes = jnp.dtype(t_f.dtype).itemsize
    n_elems = n_rows * LANES

    partials = pl.pallas_call(
        kernel,
        out_shape=jax.ShapeDtypeStruct((num_shards, 8, LANES), jnp.float32),
        grid_spec=pltpu.PrefetchScalarGridSpec(
            num_scalar_prefetch=0,
            grid=(num_shards, tiles_per_shard),
            in_specs=[
                pl.BlockSpec((tile_rows, LANES), data_map),            # folded probs
                pl.BlockSpec((tile_rows, LANES), data_map),            # folded targets
                pl.BlockSpec((CHUNK_ROWS, LANES), lambda s, j: (0, 0)),  # resident -weights
            ],
            out_specs=pl.BlockSpec((1, 8, LANES), lambda s, j: (s, 0, 0)),
            scratch_shapes=[pltpu.VMEM((8, LANES), jnp.float32)],
        ),
        compiler_params=pltpu.CompilerParams(
            dimension_semantics=("parallel", "arbitrary")),
        cost_estimate=pl.CostEstimate(
            flops=(8 if binary_targets else 11) * n_elems,
            transcendentals=(1 if binary_targets else 2) * n_elems,
            bytes_accessed=(x_bytes + t_bytes) * n_elems + 4 * num_shards * 8 * LANES,
        ),
    )(x_f, t_f, _NEGW_BLOCK)

    return jnp.sum(partials[:, 0, 0])


def _reference(clipwise, target):
    x = jnp.where(jnp.isnan(clipwise), 0.0, clipwise)
    x = jnp.where(jnp.isinf(x), 0.0, x)
    t = target.astype(jnp.float32)
    bce = -(t * jnp.maximum(jnp.log(x), -100.0)
            + (1.0 - t) * jnp.maximum(jnp.log(1.0 - x), -100.0))
    return jnp.mean(bce * CLASS_WEIGHTS[None, :])


if __name__ == "__main__":
    key = jax.random.PRNGKey(0)
    k1, k2, k3, k4, k5, k6 = jax.random.split(key, 6)

    # --- Case 1: B % 16 == 0 (copy-free fold), float targets -> two-log path,
    #     NaN / +Inf / -Inf sanitization exercised. ------------------------------
    B1 = 32
    x1 = jax.nn.sigmoid(jax.random.normal(k1, (B1, NUM_CLASSES), jnp.float32))
    x1 = x1.at[0, 0].set(jnp.nan).at[1, 3].set(jnp.inf).at[2, 5].set(-jnp.inf)
    t1 = (jax.random.uniform(k2, (B1, NUM_CLASSES)) > 0.5).astype(jnp.float32)
    out1 = class_weighted_panns_loss({"clipwise_output": x1}, t1)
    jax.block_until_ready(out1)
    ref1 = _reference(x1, t1)
    assert jnp.allclose(out1, ref1, rtol=1e-4, atol=1e-6), (out1, ref1)

    # --- Case 2: B % 16 != 0 (padded fallback), bool targets -> single-log path. --
    B2 = 52
    x2 = jax.nn.sigmoid(jax.random.normal(k3, (B2, NUM_CLASSES), jnp.float32))
    x2 = x2.at[5, 7].set(jnp.nan)
    t2 = jax.random.uniform(k4, (B2, NUM_CLASSES)) > 0.5
    out2 = class_weighted_panns_loss({"clipwise_output": x2}, t2)
    jax.block_until_ready(out2)
    ref2 = _reference(x2, t2)
    assert jnp.allclose(out2, ref2, rtol=1e-4, atol=1e-6), (out2, ref2)

    # --- Case 3: force small tiles so the multi-tile, two-shard grid (with an odd
    #     tile count -> one masked phantom tile) is exercised at a small batch. ----
    B3 = 2064                                   # n_rows = 387, n_tiles = 3 at tile_rows = 192
    x3 = jax.nn.sigmoid(jax.random.normal(k5, (B3, NUM_CLASSES), jnp.float32))
    t3 = (jax.random.uniform(k6, (B3, NUM_CLASSES)) > 0.5).astype(jnp.int8)
    out3 = class_weighted_panns_loss({"clipwise_output": x3}, t3, max_chunks_per_tile=1)
    jax.block_until_ready(out3)
    ref3 = _reference(x3, t3)
    assert jnp.allclose(out3, ref3, rtol=1e-4, atol=1e-6), (out3, ref3)

    print("KERNEL_OK")
</pallas_src>

<mosaic_0001>
module attributes {stable_mosaic.version = 11 : i64} {
  func.func @kernel(%arg0: i32, %arg1: i32, %arg2: memref<192x128xf32, #tpu.memory_space<vmem>>, %arg3: memref<192x128xf32, #tpu.memory_space<vmem>>, %arg4: memref<192x128xf32, #tpu.memory_space<vmem>>, %arg5: memref<1x8x128xf32, #tpu.memory_space<vmem>>, %arg6: memref<8x128xf32, #tpu.memory_space<vmem>>) attributes {dimension_semantics = [#tpu.dimension_semantics<parallel>, #tpu.dimension_semantics<arbitrary>], iteration_bounds = array<i64: 1, 1>, scalar_prefetch = 0 : i64, scratch_operands = 1 : i64, tpu.core_type = #tpu.core_type<tc>, window_params = [{transform_indices = @transform_0, window_bounds = array<i64: 192, 128>}, {transform_indices = @transform_1, window_bounds = array<i64: 192, 128>}, {pipeline_mode = #tpu.pipeline_mode<synchronous>, transform_indices = @transform_2, window_bounds = array<i64: 192, 128>}, {transform_indices = @transform_3, window_bounds = array<i64: 1, 8, 128>}]} {
    %c0_i32 = arith.constant 0 : i32
    %0 = arith.cmpi eq, %arg1, %c0_i32 : i32
    %1 = arith.extui %0 : i1 to i32
    %c0_i32_0 = arith.constant 0 : i32
    %2 = arith.cmpi ne, %1, %c0_i32_0 : i32
    scf.if %2 {
      %cst_20 = arith.constant 0.000000e+00 : f32
      %44 = vector.broadcast %cst_20 : f32 to vector<8x128xf32>
      %c0_21 = arith.constant 0 : index
      %c0_22 = arith.constant 0 : index
      %45 = vector.load %arg6[%c0_21, %c0_22] : memref<8x128xf32, #tpu.memory_space<vmem>>, vector<8x128xf32>
      tpu.vector_store %arg6[%c0_21, %c0_22], %44 {strides = array<i32>} : memref<8x128xf32, #tpu.memory_space<vmem>>, vector<8x128xf32>,
    } else {
    }
    %c1_i32 = arith.constant 1 : i32
    %3 = arith.muli %arg0, %c1_i32 : i32
    %4 = arith.addi %3, %arg1 : i32
    %c192_i32 = arith.constant 192 : i32
    %5 = arith.muli %4, %c192_i32 : i32
    %c0 = arith.constant 0 : index
    %c0_1 = arith.constant 0 : index
    %6 = vector.load %arg4[%c0, %c0_1] : memref<192x128xf32, #tpu.memory_space<vmem>>, vector<192x128xf32>
    %7 = tpu.iota {dimensions = array<i32: 0>} : vector<192x128xi32>
    %cst = arith.constant 0.000000e+00 : f32
    %8 = vector.broadcast %cst : f32 to vector<8x128xf32>
    %c6_i32 = arith.constant 6 : i32
    %9 = arith.subi %c6_i32, %5 : i32
    %c0_i32_2 = arith.constant 0 : i32
    %10 = arith.subi %9, %c0_i32_2 : i32
    %11 = vector.broadcast %10 : i32 to vector<192x128xi32>
    %12 = arith.cmpi slt, %7, %11 : vector<192x128xi32>
    %c0_3 = arith.constant 0 : index
    %c0_4 = arith.constant 0 : index
    %13 = vector.load %arg2[%c0_3, %c0_4] : memref<192x128xf32, #tpu.memory_space<vmem>>, vector<192x128xf32>
    %14 = math.absf %13 : vector<192x128xf32>
    %cst_5 = arith.constant 0x7F800000 : f32
    %15 = vector.broadcast %cst_5 : f32 to vector<192x128xf32>
    %16 = arith.cmpf olt, %14, %15 : vector<192x128xf32>
    %17 = arith.andi %16, %12 : vector<192x128xi1>
    %cst_6 = arith.constant 0.000000e+00 : f32
    %18 = vector.broadcast %cst_6 : f32 to vector<192x128xf32>
    %19 = arith.select %17, %13, %18 : vector<192x128xi1>, vector<192x128xf32>
    %c0_7 = arith.constant 0 : index
    %c0_8 = arith.constant 0 : index
    %20 = vector.load %arg3[%c0_7, %c0_8] : memref<192x128xf32, #tpu.memory_space<vmem>>, vector<192x128xf32>
    %cst_9 = arith.constant 0.000000e+00 : f32
    %21 = vector.broadcast %cst_9 : f32 to vector<192x128xf32>
    %22 = arith.select %12, %20, %21 : vector<192x128xi1>, vector<192x128xf32>
    %23 = math.log %19 : vector<192x128xf32>
    %cst_10 = arith.constant -1.000000e+02 : f32
    %24 = vector.broadcast %cst_10 : f32 to vector<192x128xf32>
    %25 = arith.maximumf %23, %24 : vector<192x128xf32>
    %cst_11 = arith.constant 1.000000e+00 : f32
    %26 = vector.broadcast %cst_11 : f32 to vector<192x128xf32>
    %27 = arith.subf %26, %19 : vector<192x128xf32>
    %28 = math.log %27 : vector<192x128xf32>
    %cst_12 = arith.constant -1.000000e+02 : f32
    %29 = vector.broadcast %cst_12 : f32 to vector<192x128xf32>
    %30 = arith.maximumf %28, %29 : vector<192x128xf32>
    %31 = arith.subf %25, %30 : vector<192x128xf32>
    %32 = arith.mulf %22, %31 : vector<192x128xf32>
    %33 = arith.addf %30, %32 : vector<192x128xf32>
    %34 = arith.mulf %6, %33 : vector<192x128xf32>
    %35 = vector.shape_cast %34 : vector<192x128xf32> to vector<24x8x128xf32>
    %cst_13 = arith.constant dense<0.000000e+00> : vector<8x128xf32>
    %36 = vector.multi_reduction <add>, %35, %cst_13 [0] : vector<24x8x128xf32> to vector<8x128xf32>
    %37 = arith.addf %8, %36 : vector<8x128xf32>
    %c0_14 = arith.constant 0 : index
    %c0_15 = arith.constant 0 : index
    %38 = vector.load %arg6[%c0_14, %c0_15] : memref<8x128xf32, #tpu.memory_space<vmem>>, vector<8x128xf32>
    %39 = arith.addf %38, %37 : vector<8x128xf32>
    %c0_16 = arith.constant 0 : index
    %c0_17 = arith.constant 0 : index
    %40 = vector.load %arg6[%c0_16, %c0_17] : memref<8x128xf32, #tpu.memory_space<vmem>>, vector<8x128xf32>
    tpu.vector_store %arg6[%c0_16, %c0_17], %39 {strides = array<i32>} : memref<8x128xf32, #tpu.memory_space<vmem>>, vector<8x128xf32>,
    %c0_i32_18 = arith.constant 0 : i32
    %41 = arith.cmpi eq, %arg1, %c0_i32_18 : i32
    %42 = arith.extui %41 : i1 to i32
    %c0_i32_19 = arith.constant 0 : i32
    %43 = arith.cmpi ne, %42, %c0_i32_19 : i32
    scf.if %43 {
      %c0_20 = arith.constant 0 : index
      %c0_21 = arith.constant 0 : index
      %44 = vector.load %arg6[%c0_20, %c0_21] : memref<8x128xf32, #tpu.memory_space<vmem>>, vector<8x128xf32>
      %45 = vector.shape_cast %44 : vector<8x128xf32> to vector<1x8x128xf32>
      %cst_22 = arith.constant dense<0.000000e+00> : vector<1xf32>
      %46 = vector.multi_reduction <add>, %45, %cst_22 [1, 2] : vector<1x8x128xf32> to vector<1xf32>
      %47 = vector.shape_cast %46 : vector<1xf32> to vector<1x1x1xf32>
      %48 = vector.extract %47[0, 0, 0] : f32 from vector<1x1x1xf32>
      %cst_23 = arith.constant 0.00130208337 : f32
      %49 = arith.mulf %48, %cst_23 : f32
      %50 = vector.broadcast %49 : f32 to vector<1x8x128xf32>
      %c0_24 = arith.constant 0 : index
      %c0_25 = arith.constant 0 : index
      %c0_26 = arith.constant 0 : index
      %51 = vector.load %arg5[%c0_24, %c0_25, %c0_26] : memref<1x8x128xf32, #tpu.memory_space<vmem>>, vector<1x8x128xf32>
      tpu.vector_store %arg5[%c0_24, %c0_25, %c0_26], %50 {strides = array<i32>} : memref<1x8x128xf32, #tpu.memory_space<vmem>>, vector<1x8x128xf32>,
    } else {
    }
    return
  }
  func.func @transform_0(%arg0: i32, %arg1: i32) -> (i32, i32) {
    %c1_i32 = arith.constant 1 : i32
    %0 = arith.muli %arg0, %c1_i32 : i32
    %1 = arith.addi %0, %arg1 : i32
    %c0_i32 = arith.constant 0 : i32
    %2 = arith.minsi %1, %c0_i32 : i32
    %c0_i32_0 = arith.constant 0 : i32
    %c0_i32_1 = arith.constant 0 : i32
    return %2, %c0_i32_0 : i32, i32
  }
  func.func @transform_1(%arg0: i32, %arg1: i32) -> (i32, i32) {
    %c1_i32 = arith.constant 1 : i32
    %0 = arith.muli %arg0, %c1_i32 : i32
    %1 = arith.addi %0, %arg1 : i32
    %c0_i32 = arith.constant 0 : i32
    %2 = arith.minsi %1, %c0_i32 : i32
    %c0_i32_0 = arith.constant 0 : i32
    %c0_i32_1 = arith.constant 0 : i32
    return %2, %c0_i32_0 : i32, i32
  }
  func.func @transform_2(%arg0: i32, %arg1: i32) -> (i32, i32) {
    %c0_i32 = arith.constant 0 : i32
    %c0_i32_0 = arith.constant 0 : i32
    %c0_i32_1 = arith.constant 0 : i32
    return %c0_i32, %c0_i32_0 : i32, i32
  }
  func.func @transform_3(%arg0: i32, %arg1: i32) -> (i32, i32, i32) {
    %c0_i32 = arith.constant 0 : i32
    %c0_i32_0 = arith.constant 0 : i32
    %c0_i32_1 = arith.constant 0 : i32
    return %arg0, %c0_i32, %c0_i32_0 : i32, i32, i32
  }
}

</mosaic_0001>

<llo_original>
// kernel: tpu_custom_call.1
$region0: #{tpu_custom_call.1}
  #allocation0 [shape = 'u32[]', space=smem, size = 0x4, offset = 0x4, fixed_abs, tag = 'smem constant byte address 0x4 - core index']
  #allocation1 [shape = 'u32[72,128]{1,0:T(1,128)}', space=vmem, size = 0x9000, scoped, tag = 'internal scratch']
  #allocation2 [shape = 'f32[8,128]{1,0:T(8,128)}', space=vmem, size = 0x1000, scoped, tag = 'scratch operand']
  %s0 = inlined_call_operand.hbm [shape: f32[6,128], index: 0, kind: input, shape index: {}]
  %s1 = inlined_call_operand.hbm [shape: f32[6,128], index: 1, kind: input, shape index: {}]
  %s2 = inlined_call_operand.hbm [shape: f32[192,128], index: 2, kind: input, shape index: {}]
  %s3 = inlined_call_operand.hbm [shape: f32[1,8,128], index: 3, kind: output, shape index: {}]
  %s4 = sld [smem:[#allocation0]]
  $region42: #{tpu_custom_call.1} parent=0
    _
  %s6 = ssub.s32 1, %s4
  %s7 = scalar_select 0, %s6, %s4
  $region1: #{tpu_custom_call.1} parent=0
    #allocation3 [shape = 'u8[98304]{0}', space=vmem, size = 0x18000, scoped, tag = 'input window, operand 0, single buffered']
    #allocation4 [shape = 's32[1]{0}', space=sflag, size = 0x4, scoped, tag = 'scoped memory for tpu_custom_call.1']
    #allocation5 [shape = 's32[1]{0}', space=sflag, size = 0x4, scoped, tag = 'scoped memory for tpu_custom_call.1']
    #allocation6 [shape = 'u8[98304]{0}', space=vmem, size = 0x18000, scoped, tag = 'input window, operand 1, single buffered']
    #allocation7 [shape = 's32[1]{0}', space=sflag, size = 0x4, scoped, tag = 'scoped memory for tpu_custom_call.1']
    #allocation8 [shape = 'u8[98304]{0}', space=vmem, size = 0x18000, scoped, tag = 'input window, operand 2, single buffered']
    #allocation9 [shape = 'u8[4096]{0}', space=vmem, size = 0x1000, scoped, tag = 'output window, operand 0, single buffered']
    %8 = vsyncpa [#allocation4], 0
    %9 = vsyncpa [#allocation7], 0
    %10 = vsyncpa [#allocation5], 0
    // Predicated region
    $region2: #{tpu_custom_call.1} parent=1 // pred_check
      _
    $region3: #{tpu_custom_call.1} parent=1 // pred_check_branch
      %12 = sbr.rel (0) target = $region5
    $region4: #{tpu_custom_call.1} parent=1 // pred_region
      %s13 = sadd.s32 0, 0
      %p14 = scmp.lt.s32.totalorder %s13, 0
      %s15 = scalar_select %p14, %s13, 0
      %s16 = smul.u32 24, %s15
      %s17 = ssub.s32 1, %s16
      %s18 = smul.u32 8, %s17
      %s19 = ssub.s32 192, %s18
      %s20 = sshll.u32 %s19, 4
      %21 = vsyncadd [#allocation4], %s20
      %p22 = scmp.ne.s32.totalorder 0, %s18
      %s23 = smul.addr %s16, 8
      %s24 = scalar_lea.hbm %s0, %s23
      %s25 = smul.u32 8, %s17
      %s26 = sshll.u32 %s24, 4
      %s27 = int_to_ptr.hbm [resolvable:$true] %s26
      %s28 = sshll.u32 [#allocation3], 4
      %s29 = int_to_ptr.vmem [resolvable:$true] %s28
      %s30 = sshll.u32 %s25, 4
      %34 = dma.hbm_to_vmem [thread:$0]  (%p22), %s27, %s30, %s29, [#allocation4], 128, 128, 8
    $region5: #{tpu_custom_call.1} parent=1 // pred_fallthru
      _
    // Predicated region
    $region6: #{tpu_custom_call.1} parent=1 // pred_check
      _
    $region7: #{tpu_custom_call.1} parent=1 // pred_check_branch
      %36 = sbr.rel (0) target = $region9
    $region8: #{tpu_custom_call.1} parent=1 // pred_region
      %s37 = sadd.s32 0, 0
      %p38 = scmp.lt.s32.totalorder %s37, 0
      %s39 = scalar_select %p38, %s37, 0
      %s40 = smul.u32 24, %s39
      %s41 = ssub.s32 1, %s40
      %s42 = smul.u32 8, %s41
      %s43 = ssub.s32 192, %s42
      %s44 = sshll.u32 %s43, 4
      %45 = vsyncadd [#allocation7], %s44
      %p46 = scmp.ne.s32.totalorder 0, %s42
      %s47 = smul.addr %s40, 8
      %s48 = scalar_lea.hbm %s1, %s47
      %s49 = smul.u32 8, %s41
      %s50 = sshll.u32 %s48, 4
      %s51 = int_to_ptr.hbm [resolvable:$true] %s50
      %s52 = sshll.u32 [#allocation6], 4
      %s53 = int_to_ptr.vmem [resolvable:$true] %s52
      %s54 = sshll.u32 %s49, 4
      %58 = dma.hbm_to_vmem [thread:$0]  (%p46), %s51, %s54, %s53, [#allocation7], 128, 128, 8
    $region9: #{tpu_custom_call.1} parent=1 // pred_fallthru
      _
    // Predicated region
    $region10: #{tpu_custom_call.1} parent=1 // pred_check
      _
    $region11: #{tpu_custom_call.1} parent=1 // pred_check_branch
      %60 = sbr.rel (0) target = $region13
    $region12: #{tpu_custom_call.1} parent=1 // pred_region
      %62 = vsyncadd [#allocation7], 0
      %s63 = sshll.u32 %s2, 4
      %s64 = int_to_ptr.hbm [resolvable:$true] %s63
      %s65 = sshll.u32 [#allocation8], 4
      %s66 = int_to_ptr.vmem [resolvable:$true] %s65
      %71 = dma.hbm_to_vmem [thread:$0]  %s64, 3072, %s66, [#allocation7], 128, 128, 8
    $region13: #{tpu_custom_call.1} parent=1 // pred_fallthru
      _
    // Predicated region
    $region14: #{tpu_custom_call.1} parent=1 // pred_check
      _
    $region15: #{tpu_custom_call.1} parent=1 // pred_check_branch
      %73 = sbr.rel (0) target = $region17
    $region16: #{tpu_custom_call.1} parent=1 // pred_region
      %75 = dma.done [#allocation4], 3072
    $region17: #{tpu_custom_call.1} parent=1 // pred_fallthru
      _
    // Predicated region
    $region18: #{tpu_custom_call.1} parent=1 // pred_check
      _
    $region19: #{tpu_custom_call.1} parent=1 // pred_check_branch
      %77 = sbr.rel (0) target = $region21
    $region20: #{tpu_custom_call.1} parent=1 // pred_region
      %79 = dma.done [#allocation7], 3072
    $region21: #{tpu_custom_call.1} parent=1 // pred_fallthru
      _
    // Predicated region
    $region22: #{tpu_custom_call.1} parent=1 // pred_check
      _
    $region23: #{tpu_custom_call.1} parent=1 // pred_check_branch
      %81 = sbr.rel (0) target = $region25
    $region24: #{tpu_custom_call.1} parent=1 // pred_region
      %83 = dma.done [#allocation7], 3072
    $region25: #{tpu_custom_call.1} parent=1 // pred_fallthru
      _
    %s84 = sadd.s32 0, 0
    %p85 = scmp.lt.s32.totalorder %s84, 0
    %s86 = scalar_select %p85, %s84, 0
    %s87 = smul.u32 24, %s86
    %s88 = ssub.s32 1, %s87
    %s89 = smul.u32 8, %s88
    %s90 = sadd.s32 0, 0
    %p91 = scmp.lt.s32.totalorder %s90, 0
    %s92 = scalar_select %p91, %s90, 0
    %s93 = smul.u32 24, %s92
    %s94 = ssub.s32 1, %s93
    %s95 = smul.u32 8, %s94
    %p96 = scmp.eq.s32.totalorder 0, 0
    // Predicated region
    $region26: #{tpu_custom_call.1} parent=1 // pred_check
      %p97 = pneg %p96
    $region27: #{tpu_custom_call.1} parent=1 // pred_check_branch
      %99 = sbr.rel (%p97) target = $region29
    $region28: #{tpu_custom_call.1} parent=1 // pred_region
      %100 = vst [vmem:[#allocation2] sm:$0xff] 0.0
    $region29: #{tpu_custom_call.1} parent=1 // pred_fallthru
      _
    %s101 = sadd.s32 0, 0
    %s102 = smul.u32 %s101, 192
    %v103 = vld [vmem:[#allocation8] sm:$0xff]
    %v104 = vld [vmem:[#allocation8 + $0x8] sm:$0xff]
    %v105 = vld [vmem:[#allocation8 + $0x10] sm:$0xff]
    %v106 = vld [vmem:[#allocation8 + $0x18] sm:$0xff]
    %v107 = vld [vmem:[#allocation8 + $0x20] sm:$0xff]
    %v108 = vld [vmem:[#allocation8 + $0x28] sm:$0xff]
    %v109 = vld [vmem:[#allocation8 + $0x30] sm:$0xff]
    %v110 = vld [vmem:[#allocation8 + $0x38] sm:$0xff]
    %v111 = vld [vmem:[#allocation8 + $0x40] sm:$0xff]
    %v112 = vld [vmem:[#allocation8 + $0x48] sm:$0xff]
    %v113 = vld [vmem:[#allocation8 + $0x50] sm:$0xff]
    %v114 = vld [vmem:[#allocation8 + $0x58] sm:$0xff]
    %v115 = vld [vmem:[#allocation8 + $0x60] sm:$0xff]
    %v116 = vld [vmem:[#allocation8 + $0x68] sm:$0xff]
    %v117 = vld [vmem:[#allocation8 + $0x70] sm:$0xff]
    %v118 = vld [vmem:[#allocation8 + $0x78] sm:$0xff]
    %v119 = vld [vmem:[#allocation8 + $0x80] sm:$0xff]
    %v120 = vld [vmem:[#allocation8 + $0x88] sm:$0xff]
    %v121 = vld [vmem:[#allocation8 + $0x90] sm:$0xff]
    %v122 = vld [vmem:[#allocation8 + $0x98] sm:$0xff]
    %v123 = vld [vmem:[#allocation8 + $0xa0] sm:$0xff]
    %v124 = vld [vmem:[#allocation8 + $0xa8] sm:$0xff]
    %v125 = vld [vmem:[#allocation8 + $0xb0] sm:$0xff]
    %v126 = vld [vmem:[#allocation8 + $0xb8] sm:$0xff]
    %v127 = vlaneseq
    %v128 = vshrl.u32 %v127, 7
    %v129 = vadd.s32 %v128, 8
    %v130 = vadd.s32 %v128, 16
    %v131 = vadd.s32 %v128, 24
    %v132 = vadd.s32 %v128, 32
    %v133 = vadd.s32 %v128, 40
    %v134 = vadd.s32 %v128, 48
    %v135 = vadd.s32 %v128, 56
    %v136 = vadd.s32 %v128, 64
    %v137 = vadd.s32 %v128, 72
    %v138 = vadd.s32 %v128, 80
    %v139 = vadd.s32 %v128, 88
    %v140 = vadd.s32 %v128, 96
    %v141 = vadd.s32 %v128, 104
    %v142 = vadd.s32 %v128, 112
    %v143 = vadd.s32 %v128, 120
    %v144 = vadd.s32 %v128, 128
    %v145 = vadd.s32 %v128, 136
    %v146 = vadd.s32 %v128, 144
    %v147 = vadd.s32 %v128, 152
    %v148 = vadd.s32 %v128, 160
    %v149 = vadd.s32 %v128, 168
    %v150 = vadd.s32 %v128, 176
    %v151 = vadd.s32 %v128, 184
    %s152 = ssub.s32 6, %s102
    %v153 = vstv %s152
    %vm154 = vcmp.lt.s32.totalorder %v128, %v153
    %vm155 = vcmp.lt.s32.totalorder %v129, %v153
    %vm156 = vcmp.lt.s32.totalorder %v130, %v153
    %vm157 = vcmp.lt.s32.totalorder %v131, %v153
    %vm158 = vcmp.lt.s32.totalorder %v132, %v153
    %vm159 = vcmp.lt.s32.totalorder %v133, %v153
    %vm160 = vcmp.lt.s32.totalorder %v134, %v153
    %vm161 = vcmp.lt.s32.totalorder %v135, %v153
    %vm162 = vcmp.lt.s32.totalorder %v136, %v153
    %vm163 = vcmp.lt.s32.totalorder %v137, %v153
    %vm164 = vcmp.lt.s32.totalorder %v138, %v153
    %vm165 = vcmp.lt.s32.totalorder %v139, %v153
    %vm166 = vcmp.lt.s32.totalorder %v140, %v153
    %vm167 = vcmp.lt.s32.totalorder %v141, %v153
    %vm168 = vcmp.lt.s32.totalorder %v142, %v153
    %vm169 = vcmp.lt.s32.totalorder %v143, %v153
    %vm170 = vcmp.lt.s32.totalorder %v144, %v153
    %vm171 = vcmp.lt.s32.totalorder %v145, %v153
    %vm172 = vcmp.lt.s32.totalorder %v146, %v153
    %vm173 = vcmp.lt.s32.totalorder %v147, %v153
    %vm174 = vcmp.lt.s32.totalorder %v148, %v153
    %vm175 = vcmp.lt.s32.totalorder %v149, %v153
    %vm176 = vcmp.lt.s32.totalorder %v150, %v153
    %vm177 = vcmp.lt.s32.totalorder %v151, %v153
    %v178 = vld [vmem:[#allocation3] sm:$0xff]
    %v179 = vld [vmem:[#allocation3 + $0x8] sm:$0xff]
    %v180 = vld [vmem:[#allocation3 + $0x10] sm:$0xff]
    %v181 = vld [vmem:[#allocation3 + $0x18] sm:$0xff]
    %v182 = vld [vmem:[#allocation3 + $0x20] sm:$0xff]
    %v183 = vld [vmem:[#allocation3 + $0x28] sm:$0xff]
    %v184 = vld [vmem:[#allocation3 + $0x30] sm:$0xff]
    %v185 = vld [vmem:[#allocation3 + $0x38] sm:$0xff]
    %v186 = vld [vmem:[#allocation3 + $0x40] sm:$0xff]
    %v187 = vld [vmem:[#allocation3 + $0x48] sm:$0xff]
    %v188 = vld [vmem:[#allocation3 + $0x50] sm:$0xff]
    %v189 = vld [vmem:[#allocation3 + $0x58] sm:$0xff]
    %v190 = vld [vmem:[#allocation3 + $0x60] sm:$0xff]
    %v191 = vld [vmem:[#allocation3 + $0x68] sm:$0xff]
    %v192 = vld [vmem:[#allocation3 + $0x70] sm:$0xff]
    %v193 = vld [vmem:[#allocation3 + $0x78] sm:$0xff]
    %v194 = vld [vmem:[#allocation3 + $0x80] sm:$0xff]
    %v195 = vld [vmem:[#allocation3 + $0x88] sm:$0xff]
    %v196 = vld [vmem:[#allocation3 + $0x90] sm:$0xff]
    %v197 = vld [vmem:[#allocation3 + $0x98] sm:$0xff]
    %v198 = vld [vmem:[#allocation3 + $0xa0] sm:$0xff]
    %v199 = vld [vmem:[#allocation3 + $0xa8] sm:$0xff]
    %v200 = vld [vmem:[#allocation3 + $0xb0] sm:$0xff]
    %v201 = vld [vmem:[#allocation3 + $0xb8] sm:$0xff]
    %v202 = vand.u32 2147483647, %v178
    %v203 = vand.u32 2147483647, %v179
    %v204 = vand.u32 2147483647, %v180
    %v205 = vand.u32 2147483647, %v181
    %v206 = vand.u32 2147483647, %v182
    %v207 = vand.u32 2147483647, %v183
    %v208 = vand.u32 2147483647, %v184
    %v209 = vand.u32 2147483647, %v185
    %v210 = vand.u32 2147483647, %v186
    %v211 = vand.u32 2147483647, %v187
    %v212 = vand.u32 2147483647, %v188
    %v213 = vand.u32 2147483647, %v189
    %v214 = vand.u32 2147483647, %v190
    %v215 = vand.u32 2147483647, %v191
    %v216 = vand.u32 2147483647, %v192
    %v217 = vand.u32 2147483647, %v193
    %v218 = vand.u32 2147483647, %v194
    %v219 = vand.u32 2147483647, %v195
    %v220 = vand.u32 2147483647, %v196
    %v221 = vand.u32 2147483647, %v197
    %v222 = vand.u32 2147483647, %v198
    %v223 = vand.u32 2147483647, %v199
    %v224 = vand.u32 2147483647, %v200
    %v225 = vand.u32 2147483647, %v201
    %vm226 = vcmp.lt.f32.partialorder %v202, inf
    %vm227 = vcmp.lt.f32.partialorder %v203, inf
    %vm228 = vcmp.lt.f32.partialorder %v204, inf
    %vm229 = vcmp.lt.f32.partialorder %v205, inf
    %vm230 = vcmp.lt.f32.partialorder %v206, inf
    %vm231 = vcmp.lt.f32.partialorder %v207, inf
    %vm232 = vcmp.lt.f32.partialorder %v208, inf
    %vm233 = vcmp.lt.f32.partialorder %v209, inf
    %vm234 = vcmp.lt.f32.partialorder %v210, inf
    %vm235 = vcmp.lt.f32.partialorder %v211, inf
    %vm236 = vcmp.lt.f32.partialorder %v212, inf
    %vm237 = vcmp.lt.f32.partialorder %v213, inf
    %vm238 = vcmp.lt.f32.partialorder %v214, inf
    %vm239 = vcmp.lt.f32.partialorder %v215, inf
    %vm240 = vcmp.lt.f32.partialorder %v216, inf
    %vm241 = vcmp.lt.f32.partialorder %v217, inf
    %vm242 = vcmp.lt.f32.partialorder %v218, inf
    %vm243 = vcmp.lt.f32.partialorder %v219, inf
    %vm244 = vcmp.lt.f32.partialorder %v220, inf
    %vm245 = vcmp.lt.f32.partialorder %v221, inf
    %vm246 = vcmp.lt.f32.partialorder %v222, inf
    %vm247 = vcmp.lt.f32.partialorder %v223, inf
    %vm248 = vcmp.lt.f32.partialorder %v224, inf
    %vm249 = vcmp.lt.f32.partialorder %v225, inf
    %vm250 = vmand %vm226, %vm154
    %vm251 = vmand %vm227, %vm155
    %vm252 = vmand %vm228, %vm156
    %vm253 = vmand %vm229, %vm157
    %vm254 = vmand %vm230, %vm158
    %vm255 = vmand %vm231, %vm159
    %vm256 = vmand %vm232, %vm160
    %vm257 = vmand %vm233, %vm161
    %vm258 = vmand %vm234, %vm162
    %vm259 = vmand %vm235, %vm163
    %vm260 = vmand %vm236, %vm164
    %vm261 = vmand %vm237, %vm165
    %vm262 = vmand %vm238, %vm166
    %vm263 = vmand %vm239, %vm167
    %vm264 = vmand %vm240, %vm168
    %vm265 = vmand %vm241, %vm169
    %vm266 = vmand %vm242, %vm170
    %vm267 = vmand %vm243, %vm171
    %vm268 = vmand %vm244, %vm172
    %vm269 = vmand %vm245, %vm173
    %vm270 = vmand %vm246, %vm174
    %vm271 = vmand %vm247, %vm175
    %vm272 = vmand %vm248, %vm176
    %vm273 = vmand %vm249, %vm177
    %v274 = vsel %vm250, %v178, 0.0
    %v275 = vsel %vm251, %v179, 0.0
    %v276 = vsel %vm252, %v180, 0.0
    %v277 = vsel %vm253, %v181, 0.0
    %v278 = vsel %vm254, %v182, 0.0
    %v279 = vsel %vm255, %v183, 0.0
    %v280 = vsel %vm256, %v184, 0.0
    %v281 = vsel %vm257, %v185, 0.0
    %v282 = vsel %vm258, %v186, 0.0
    %v283 = vsel %vm259, %v187, 0.0
    %v284 = vsel %vm260, %v188, 0.0
    %v285 = vsel %vm261, %v189, 0.0
    %v286 = vsel %vm262, %v190, 0.0
    %v287 = vsel %vm263, %v191, 0.0
    %v288 = vsel %vm264, %v192, 0.0
    %v289 = vsel %vm265, %v193, 0.0
    %v290 = vsel %vm266, %v194, 0.0
    %v291 = vsel %vm267, %v195, 0.0
    %v292 = vsel %vm268, %v196, 0.0
    %v293 = vsel %vm269, %v197, 0.0
    %v294 = vsel %vm270, %v198, 0.0
    %v295 = vsel %vm271, %v199, 0.0
    %v296 = vsel %vm272, %v200, 0.0
    %v297 = vsel %vm273, %v201, 0.0
    %v298 = vld [vmem:[#allocation6] sm:$0xff]
    %v299 = vld [vmem:[#allocation6 + $0x8] sm:$0xff]
    %v300 = vld [vmem:[#allocation6 + $0x10] sm:$0xff]
    %v301 = vld [vmem:[#allocation6 + $0x18] sm:$0xff]
    %v302 = vld [vmem:[#allocation6 + $0x20] sm:$0xff]
    %v303 = vld [vmem:[#allocation6 + $0x28] sm:$0xff]
    %v304 = vld [vmem:[#allocation6 + $0x30] sm:$0xff]
    %v305 = vld [vmem:[#allocation6 + $0x38] sm:$0xff]
    %v306 = vld [vmem:[#allocation6 + $0x40] sm:$0xff]
    %v307 = vld [vmem:[#allocation6 + $0x48] sm:$0xff]
    %v308 = vld [vmem:[#allocation6 + $0x50] sm:$0xff]
    %v309 = vld [vmem:[#allocation6 + $0x58] sm:$0xff]
    %v310 = vld [vmem:[#allocation6 + $0x60] sm:$0xff]
    %v311 = vld [vmem:[#allocation6 + $0x68] sm:$0xff]
    %v312 = vld [vmem:[#allocation6 + $0x70] sm:$0xff]
    %v313 = vld [vmem:[#allocation6 + $0x78] sm:$0xff]
    %v314 = vld [vmem:[#allocation6 + $0x80] sm:$0xff]
    %v315 = vld [vmem:[#allocation6 + $0x88] sm:$0xff]
    %v316 = vld [vmem:[#allocation6 + $0x90] sm:$0xff]
    %v317 = vld [vmem:[#allocation6 + $0x98] sm:$0xff]
    %v318 = vld [vmem:[#allocation6 + $0xa0] sm:$0xff]
    %v319 = vld [vmem:[#allocation6 + $0xa8] sm:$0xff]
    %v320 = vld [vmem:[#allocation6 + $0xb0] sm:$0xff]
    %v321 = vld [vmem:[#allocation6 + $0xb8] sm:$0xff]
    %v322 = vsel %vm154, %v298, 0.0
    %v323 = vsel %vm155, %v299, 0.0
    %v324 = vsel %vm156, %v300, 0.0
    %v325 = vsel %vm157, %v301, 0.0
    %v326 = vsel %vm158, %v302, 0.0
    %v327 = vsel %vm159, %v303, 0.0
    %v328 = vsel %vm160, %v304, 0.0
    %v329 = vsel %vm161, %v305, 0.0
    %v330 = vsel %vm162, %v306, 0.0
    %v331 = vsel %vm163, %v307, 0.0
    %v332 = vsel %vm164, %v308, 0.0
    %v333 = vsel %vm165, %v309, 0.0
    %v334 = vsel %vm166, %v310, 0.0
    %v335 = vsel %vm167, %v311, 0.0
    %v336 = vsel %vm168, %v312, 0.0
    %v337 = vsel %vm169, %v313, 0.0
    %v338 = vsel %vm170, %v314, 0.0
    %v339 = vsel %vm171, %v315, 0.0
    %v340 = vsel %vm172, %v316, 0.0
    %v341 = vsel %vm173, %v317, 0.0
    %v342 = vsel %vm174, %v318, 0.0
    %v343 = vsel %vm175, %v319, 0.0
    %v344 = vsel %vm176, %v320, 0.0
    %v345 = vsel %vm177, %v321, 0.0
    %v346 = vlog2.pop %v274
    %v347 = vmul.f32 %v346, 0.6931472
    %v348 = vlog2.pop %v275
    %v349 = vmul.f32 %v348, 0.6931472
    %v350 = vlog2.pop %v276
    %v351 = vmul.f32 %v350, 0.6931472
    %v352 = vlog2.pop %v277
    %v353 = vmul.f32 %v352, 0.6931472
    %v354 = vlog2.pop %v278
    %v355 = vmul.f32 %v354, 0.6931472
    %v356 = vlog2.pop %v279
    %v357 = vmul.f32 %v356, 0.6931472
    %v358 = vlog2.pop %v280
    %v359 = vmul.f32 %v358, 0.6931472
    %v360 = vlog2.pop %v281
    %v361 = vmul.f32 %v360, 0.6931472
    %v362 = vlog2.pop %v282
    %v363 = vmul.f32 %v362, 0.6931472
    %v364 = vlog2.pop %v283
    %v365 = vmul.f32 %v364, 0.6931472
    %v366 = vlog2.pop %v284
    %v367 = vmul.f32 %v366, 0.6931472
    %v368 = vlog2.pop %v285
    %v369 = vmul.f32 %v368, 0.6931472
    %v370 = vlog2.pop %v286
    %v371 = vmul.f32 %v370, 0.6931472
    %v372 = vlog2.pop %v287
    %v373 = vmul.f32 %v372, 0.6931472
    %v374 = vlog2.pop %v288
    %v375 = vmul.f32 %v374, 0.6931472
    %v376 = vlog2.pop %v289
    %v377 = vmul.f32 %v376, 0.6931472
    %v378 = vlog2.pop %v290
    %v379 = vmul.f32 %v378, 0.6931472
    %v380 = vlog2.pop %v291
    %v381 = vmul.f32 %v380, 0.6931472
    %v382 = vlog2.pop %v292
    %v383 = vmul.f32 %v382, 0.6931472
    %v384 = vlog2.pop %v293
    %v385 = vmul.f32 %v384, 0.6931472
    %v386 = vlog2.pop %v294
    %v387 = vmul.f32 %v386, 0.6931472
    %v388 = vlog2.pop %v295
    %v389 = vmul.f32 %v388, 0.6931472
    %v390 = vlog2.pop %v296
    %v391 = vmul.f32 %v390, 0.6931472
    %v392 = vlog2.pop %v297
    %v393 = vmul.f32 %v392, 0.6931472
    %v394 = vmax.f32 %v347, -100.0
    %v395 = vmax.f32 %v349, -100.0
    %v396 = vmax.f32 %v351, -100.0
    %v397 = vmax.f32 %v353, -100.0
    %v398 = vmax.f32 %v355, -100.0
    %v399 = vmax.f32 %v357, -100.0
    %v400 = vmax.f32 %v359, -100.0
    %v401 = vmax.f32 %v361, -100.0
    %v402 = vmax.f32 %v363, -100.0
    %v403 = vmax.f32 %v365, -100.0
    %v404 = vmax.f32 %v367, -100.0
    %v405 = vmax.f32 %v369, -100.0
    %v406 = vmax.f32 %v371, -100.0
    %v407 = vmax.f32 %v373, -100.0
    %v408 = vmax.f32 %v375, -100.0
    %v409 = vmax.f32 %v377, -100.0
    %v410 = vmax.f32 %v379, -100.0
    %v411 = vmax.f32 %v381, -100.0
    %v412 = vmax.f32 %v383, -100.0
    %v413 = vmax.f32 %v385, -100.0
    %v414 = vmax.f32 %v387, -100.0
    %v415 = vmax.f32 %v389, -100.0
    %v416 = vmax.f32 %v391, -100.0
    %v417 = vmax.f32 %v393, -100.0
    %v418 = vsub.f32 1.0, %v274
    %v419 = vsub.f32 1.0, %v275
    %v420 = vsub.f32 1.0, %v276
    %v421 = vsub.f32 1.0, %v277
    %v422 = vsub.f32 1.0, %v278
    %v423 = vsub.f32 1.0, %v279
    %v424 = vsub.f32 1.0, %v280
    %v425 = vsub.f32 1.0, %v281
    %v426 = vsub.f32 1.0, %v282
    %v427 = vsub.f32 1.0, %v283
    %v428 = vsub.f32 1.0, %v284
    %v429 = vsub.f32 1.0, %v285
    %v430 = vsub.f32 1.0, %v286
    %v431 = vsub.f32 1.0, %v287
    %v432 = vsub.f32 1.0, %v288
    %v433 = vsub.f32 1.0, %v289
    %v434 = vsub.f32 1.0, %v290
    %v435 = vsub.f32 1.0, %v291
    %v436 = vsub.f32 1.0, %v292
    %v437 = vsub.f32 1.0, %v293
    %v438 = vsub.f32 1.0, %v294
    %v439 = vsub.f32 1.0, %v295
    %v440 = vsub.f32 1.0, %v296
    %v441 = vsub.f32 1.0, %v297
    %v442 = vlog2.pop %v418
    %v443 = vmul.f32 %v442, 0.6931472
    %v444 = vlog2.pop %v419
    %v445 = vmul.f32 %v444, 0.6931472
    %v446 = vlog2.pop %v420
    %v447 = vmul.f32 %v446, 0.6931472
    %v448 = vlog2.pop %v421
    %v449 = vmul.f32 %v448, 0.6931472
    %v450 = vlog2.pop %v422
    %v451 = vmul.f32 %v450, 0.6931472
    %v452 = vlog2.pop %v423
    %v453 = vmul.f32 %v452, 0.6931472
    %v454 = vlog2.pop %v424
    %v455 = vmul.f32 %v454, 0.6931472
    %v456 = vlog2.pop %v425
    %v457 = vmul.f32 %v456, 0.6931472
    %v458 = vlog2.pop %v426
    %v459 = vmul.f32 %v458, 0.6931472
    %v460 = vlog2.pop %v427
    %v461 = vmul.f32 %v460, 0.6931472
    %v462 = vlog2.pop %v428
    %v463 = vmul.f32 %v462, 0.6931472
    %v464 = vlog2.pop %v429
    %v465 = vmul.f32 %v464, 0.6931472
    %v466 = vlog2.pop %v430
    %v467 = vmul.f32 %v466, 0.6931472
    %v468 = vlog2.pop %v431
    %v469 = vmul.f32 %v468, 0.6931472
    %v470 = vlog2.pop %v432
    %v471 = vmul.f32 %v470, 0.6931472
    %v472 = vlog2.pop %v433
    %v473 = vmul.f32 %v472, 0.6931472
    %v474 = vlog2.pop %v434
    %v475 = vmul.f32 %v474, 0.6931472
    %v476 = vlog2.pop %v435
    %v477 = vmul.f32 %v476, 0.6931472
    %v478 = vlog2.pop %v436
    %v479 = vmul.f32 %v478, 0.6931472
    %v480 = vlog2.pop %v437
    %v481 = vmul.f32 %v480, 0.6931472
    %v482 = vlog2.pop %v438
    %v483 = vmul.f32 %v482, 0.6931472
    %v484 = vlog2.pop %v439
    %v485 = vmul.f32 %v484, 0.6931472
    %v486 = vlog2.pop %v440
    %v487 = vmul.f32 %v486, 0.6931472
    %v488 = vlog2.pop %v441
    %v489 = vmul.f32 %v488, 0.6931472
    %v490 = vmax.f32 %v443, -100.0
    %v491 = vmax.f32 %v445, -100.0
    %v492 = vmax.f32 %v447, -100.0
    %v493 = vmax.f32 %v449, -100.0
    %v494 = vmax.f32 %v451, -100.0
    %v495 = vmax.f32 %v453, -100.0
    %v496 = vmax.f32 %v455, -100.0
    %v497 = vmax.f32 %v457, -100.0
    %v498 = vmax.f32 %v459, -100.0
    %v499 = vmax.f32 %v461, -100.0
    %v500 = vmax.f32 %v463, -100.0
    %v501 = vmax.f32 %v465, -100.0
    %v502 = vmax.f32 %v467, -100.0
    %v503 = vmax.f32 %v469, -100.0
    %v504 = vmax.f32 %v471, -100.0
    %v505 = vmax.f32 %v473, -100.0
    %v506 = vmax.f32 %v475, -100.0
    %v507 = vmax.f32 %v477, -100.0
    %v508 = vmax.f32 %v479, -100.0
    %v509 = vmax.f32 %v481, -100.0
    %v510 = vmax.f32 %v483, -100.0
    %v511 = vmax.f32 %v485, -100.0
    %v512 = vmax.f32 %v487, -100.0
    %v513 = vmax.f32 %v489, -100.0
    %v514 = vsub.f32 %v394, %v490
    %v515 = vsub.f32 %v395, %v491
    %v516 = vsub.f32 %v396, %v492
    %v517 = vsub.f32 %v397, %v493
    %v518 = vsub.f32 %v398, %v494
    %v519 = vsub.f32 %v399, %v495
    %v520 = vsub.f32 %v400, %v496
    %v521 = vsub.f32 %v401, %v497
    %v522 = vsub.f32 %v402, %v498
    %v523 = vsub.f32 %v403, %v499
    %v524 = vsub.f32 %v404, %v500
    %v525 = vsub.f32 %v405, %v501
    %v526 = vsub.f32 %v406, %v502
    %v527 = vsub.f32 %v407, %v503
    %v528 = vsub.f32 %v408, %v504
    %v529 = vsub.f32 %v409, %v505
    %v530 = vsub.f32 %v410, %v506
    %v531 = vsub.f32 %v411, %v507
    %v532 = vsub.f32 %v412, %v508
    %v533 = vsub.f32 %v413, %v509
    %v534 = vsub.f32 %v414, %v510
    %v535 = vsub.f32 %v415, %v511
    %v536 = vsub.f32 %v416, %v512
    %v537 = vsub.f32 %v417, %v513
    %v538 = vmul.f32 %v322, %v514
    %v539 = vmul.f32 %v323, %v515
    %v540 = vmul.f32 %v324, %v516
    %v541 = vmul.f32 %v325, %v517
    %v542 = vmul.f32 %v326, %v518
    %v543 = vmul.f32 %v327, %v519
    %v544 = vmul.f32 %v328, %v520
    %v545 = vmul.f32 %v329, %v521
    %v546 = vmul.f32 %v330, %v522
    %v547 = vmul.f32 %v331, %v523
    %v548 = vmul.f32 %v332, %v524
    %v549 = vmul.f32 %v333, %v525
    %v550 = vmul.f32 %v334, %v526
    %v551 = vmul.f32 %v335, %v527
    %v552 = vmul.f32 %v336, %v528
    %v553 = vmul.f32 %v337, %v529
    %v554 = vmul.f32 %v338, %v530
    %v555 = vmul.f32 %v339, %v531
    %v556 = vmul.f32 %v340, %v532
    %v557 = vmul.f32 %v341, %v533
    %v558 = vmul.f32 %v342, %v534
    %v559 = vmul.f32 %v343, %v535
    %v560 = vmul.f32 %v344, %v536
    %v561 = vmul.f32 %v345, %v537
    %v562 = vadd.f32 %v490, %v538
    %v563 = vadd.f32 %v491, %v539
    %v564 = vadd.f32 %v492, %v540
    %v565 = vadd.f32 %v493, %v541
    %v566 = vadd.f32 %v494, %v542
    %v567 = vadd.f32 %v495, %v543
    %v568 = vadd.f32 %v496, %v544
    %v569 = vadd.f32 %v497, %v545
    %v570 = vadd.f32 %v498, %v546
    %v571 = vadd.f32 %v499, %v547
    %v572 = vadd.f32 %v500, %v548
    %v573 = vadd.f32 %v501, %v549
    %v574 = vadd.f32 %v502, %v550
    %v575 = vadd.f32 %v503, %v551
    %v576 = vadd.f32 %v504, %v552
    %v577 = vadd.f32 %v505, %v553
    %v578 = vadd.f32 %v506, %v554
    %v579 = vadd.f32 %v507, %v555
    %v580 = vadd.f32 %v508, %v556
    %v581 = vadd.f32 %v509, %v557
    %v582 = vadd.f32 %v510, %v558
    %v583 = vadd.f32 %v511, %v559
    %v584 = vadd.f32 %v512, %v560
    %v585 = vadd.f32 %v513, %v561
    %v586 = vmul.f32 %v103, %v562
    %v587 = vmul.f32 %v104, %v563
    %v588 = vmul.f32 %v105, %v564
    %v589 = vmul.f32 %v106, %v565
    %v590 = vmul.f32 %v107, %v566
    %v591 = vmul.f32 %v108, %v567
    %v592 = vmul.f32 %v109, %v568
    %v593 = vmul.f32 %v110, %v569
    %v594 = vmul.f32 %v111, %v570
    %v595 = vmul.f32 %v112, %v571
    %v596 = vmul.f32 %v113, %v572
    %v597 = vmul.f32 %v114, %v573
    %v598 = vmul.f32 %v115, %v574
    %v599 = vmul.f32 %v116, %v575
    %v600 = vmul.f32 %v117, %v576
    %v601 = vmul.f32 %v118, %v577
    %v602 = vmul.f32 %v119, %v578
    %v603 = vmul.f32 %v120, %v579
    %v604 = vmul.f32 %v121, %v580
    %v605 = vmul.f32 %v122, %v581
    %v606 = vmul.f32 %v123, %v582
    %v607 = vmul.f32 %v124, %v583
    %v608 = vmul.f32 %v125, %v584
    %v609 = vmul.f32 %v126, %v585
    %v610 = vadd.f32 %v586, %v587
    %v611 = vadd.f32 %v610, %v588
    %v612 = vadd.f32 %v611, %v589
    %v613 = vadd.f32 %v612, %v590
    %v614 = vadd.f32 %v613, %v591
    %v615 = vadd.f32 %v614, %v592
    %v616 = vadd.f32 %v615, %v593
    %v617 = vadd.f32 %v616, %v594
    %v618 = vadd.f32 %v617, %v595
    %v619 = vadd.f32 %v618, %v596
    %v620 = vadd.f32 %v619, %v597
    %v621 = vadd.f32 %v620, %v598
    %v622 = vadd.f32 %v621, %v599
    %v623 = vadd.f32 %v622, %v600
    %v624 = vadd.f32 %v623, %v601
    %v625 = vadd.f32 %v624, %v602
    %v626 = vadd.f32 %v625, %v603
    %v627 = vadd.f32 %v626, %v604
    %v628 = vadd.f32 %v627, %v605
    %v629 = vadd.f32 %v628, %v606
    %v630 = vadd.f32 %v629, %v607
    %v631 = vadd.f32 %v630, %v608
    %v632 = vadd.f32 %v631, %v609
    %v633 = vadd.f32 %v632, 0.0
    %v634 = vld [vmem:[#allocation2] sm:$0xff]
    %v635 = vadd.f32 %v634, %v633
    %636 = vst [vmem:[#allocation2] sm:$0xff] %v635
    // Predicated region
    $region30: #{tpu_custom_call.1} parent=1 // pred_check
      %p637 = pneg %p96
    $region31: #{tpu_custom_call.1} parent=1 // pred_check_branch
      %639 = sbr.rel (%p637) target = $region33
    $region32: #{tpu_custom_call.1} parent=1 // pred_region
      %v640 = vld [vmem:[#allocation2] sm:$0xff]
      %641 = vadd.xlane.f32.xlu0 %v640
      %v642 = vpop.xlane.xlu0 %641
      %v643 = vrot.slane %v642, 4
      %v644 = vadd.f32 %v642, %v643
      %v645 = vrot.slane %v644, 2
      %v646 = vadd.f32 %v644, %v645
      %v647 = vrot.slane %v646, 1
      %v648 = vadd.f32 %v646, %v647
      %s649 = vtos %v648
      %s650 = smul.f32 %s649, 0.0013020834
      %v651 = vstv %s650
      %652 = vst [vmem:[#allocation9] sm:$0xff] %v651
    $region33: #{tpu_custom_call.1} parent=1 // pred_fallthru
      _
    // Predicated region
    $region34: #{tpu_custom_call.1} parent=1 // pred_check
      _
    $region35: #{tpu_custom_call.1} parent=1 // pred_check_branch
      %654 = sbr.rel (0) target = $region37
    $region36: #{tpu_custom_call.1} parent=1 // pred_region
      %656 = vsyncadd [#allocation5], 0
      %s658 = sshll.u32 [#allocation9], 4
      %s659 = int_to_ptr.vmem [resolvable:$true] %s658
      %s660 = sshll.u32 %s3, 4
      %s661 = int_to_ptr.hbm [resolvable:$true] %s660
      %663 = dma.vmem_to_hbm [thread:$0]  %s659, 128, %s661, [#allocation5]
    $region37: #{tpu_custom_call.1} parent=1 // pred_fallthru
      _
    // Predicated region
    $region38: #{tpu_custom_call.1} parent=1 // pred_check
      _
    $region39: #{tpu_custom_call.1} parent=1 // pred_check_branch
      %665 = sbr.rel (0) target = $region41
    $region40: #{tpu_custom_call.1} parent=1 // pred_region
      %667 = dma.done [#allocation5], 128
    $region41: #{tpu_custom_call.1} parent=1 // pred_fallthru
      _
    %668 = vsyncpa [#allocation4], 1
    %669 = vsyncpa [#allocation7], 1
    %670 = vsyncpa [#allocation5], 1

</llo_original>
